<compile_context>
chip_gen: v7x
topology: tpu7x:2x2x1
jax: 0.10.0
libtpu: 0.0.40
codegen_flags: <defaults>
</compile_context>

<pallas_src>
import functools

import jax
import jax.numpy as jnp
import numpy as np
from jax.experimental import pallas as pl
from jax.experimental.pallas import tpu as pltpu


# ----------------------------------------------------------------------------
# Parameter construction / reparametrization (glue, plain JAX)
# ----------------------------------------------------------------------------
_REPARAM_OFFSET = 2.0 ** -18
_PEDESTAL = _REPARAM_OFFSET ** 2


def _nonneg_init(x, minimum=0.0):
    # NonNegativeParametrizer.init
    del minimum
    return jnp.sqrt(jnp.maximum(x + _PEDESTAL, _PEDESTAL))


def _nonneg_forward(x, minimum=0.0):
    # NonNegativeParametrizer.forward: LowerBound then square minus pedestal
    bound = (minimum + _PEDESTAL) ** 0.5
    out = jnp.maximum(x, bound)
    return out * out - _PEDESTAL


def make_gdn_adapter_params(in_channels, *, beta_min=1e-6, gamma_init=0.1,
                            adapter_std=0.0, adapter_mean=0.0, key=None):
    """Deterministically build the stored (reparametrized) parameters."""
    C = in_channels
    beta_stored = _nonneg_init(jnp.ones((C,), jnp.float32), minimum=beta_min)
    gamma_stored = _nonneg_init(gamma_init * jnp.eye(C, dtype=jnp.float32))
    if key is None:
        key = jax.random.PRNGKey(0)
    kw, _ = jax.random.split(key)
    adapter_w = adapter_mean + adapter_std * jax.random.normal(kw, (C, C), jnp.float32)
    adapter_b = jnp.zeros((C,), jnp.float32)
    return dict(beta=beta_stored, gamma=gamma_stored,
                adapter_w=adapter_w, adapter_b=adapter_b,
                beta_min=beta_min)


# ----------------------------------------------------------------------------
# Hardware sizing helpers
# ----------------------------------------------------------------------------
@functools.lru_cache(maxsize=None)
def _vmem_capacity_bytes():
    """Physical VMEM per TensorCore (128 MiB v5e/v6e, 64 MiB v7x)."""
    try:
        info = pltpu.get_tpu_info()
        for attr in ("vmem_capacity_bytes", "vmem_bytes", "vmem_size_bytes"):
            v = getattr(info, attr, None)
            if v:
                return int(v)
    except Exception:
        pass
    return 64 * 1024 * 1024  # conservative fallback (v7x per-TC VMEM)


@functools.lru_cache(maxsize=None)
def _tensorcores_per_chip():
    try:
        kind = jax.devices()[0].device_kind.lower().replace(" ", "")
        if "v7" in kind or "tpu7" in kind:
            return 2
    except Exception:
        pass
    return 1


# ----------------------------------------------------------------------------
# Pallas kernel: per-pixel channel math on a (C, T_pix) tile (pixels on lanes)
# ----------------------------------------------------------------------------
def _gdn_adapter_kernel(x_ref, gamma_ref, beta_ref, wa_ref, ba_ref, o_ref,
                        *, inverse, small_c, matmul_bf16):
    x = x_ref[...].astype(jnp.float32)               # (C, T) upcast (bf16 I/O ok)
    gamma = gamma_ref[...]                           # (C, C)  gamma[co, ci]
    beta = beta_ref[...]                             # (C, 1)
    wa = wa_ref[...]                                 # (C, C)  (I + W_adapter)[co, ci]
    ba = ba_ref[...]                                 # (C, 1)

    def mix(w, v, b):
        """Channel mix: w (C,C) @ v (C,T) + b (C,1)."""
        if small_c:
            # VPU path for tiny C: unrolled broadcast-MACs avoid padding the
            # contraction to the 128/256-wide MXU and its issue/drain latency.
            C = w.shape[0]
            acc = w[:, 0:1] * v[0:1, :]
            for ci in range(1, C):
                acc = acc + w[:, ci:ci + 1] * v[ci:ci + 1, :]
            return acc + b
        if matmul_bf16:
            w = w.astype(jnp.bfloat16)
            v = v.astype(jnp.bfloat16)
        return jnp.dot(w, v, preferred_element_type=jnp.float32) + b

    x2 = x * x
    # F.conv2d(x**2, gamma_CxCx1x1, beta)  ==  gamma @ x2 + beta (per pixel column)
    norm = mix(gamma, x2, beta)
    norm = jnp.sqrt(norm) if inverse else jax.lax.rsqrt(norm)
    # norm + adapter(norm)  ==  (I + W) @ norm + b  (adapter residual pre-folded)
    scaled = mix(wa, norm, ba)
    o_ref[...] = (x * scaled).astype(o_ref.dtype)


def gdn_adapter_forward(x_nchw, params, *, inverse=False, block_pix=8192,
                        matmul_bf16=None):
    """Forward pass matching GDN_Adapter.forward.

    x_nchw: (N, C, H, W), float32 or bfloat16 (math stays f32 in-kernel; output
    dtype matches the input dtype).
    """
    N, C, H, W = x_nchw.shape
    hw = H * W
    io_itemsize = x_nchw.dtype.itemsize

    # reparametrize + fold the adapter residual (cheap, parameter-side glue)
    beta_eff = _nonneg_forward(params["beta"], minimum=params["beta_min"])   # (C,)
    gamma_eff = _nonneg_forward(params["gamma"])                             # (C, C)
    wa_eff = jnp.eye(C, dtype=jnp.float32) + params["adapter_w"].astype(jnp.float32)

    # NCHW -> (N, C, H*W): pure reshape, no transpose / pad / extra HBM traffic.
    x_flat = x_nchw.reshape(N, C, hw)
    beta_2d = beta_eff.reshape(C, 1)
    ba_2d = params["adapter_b"].astype(jnp.float32).reshape(C, 1)

    small_c = C <= 16
    if matmul_bf16 is None:
        matmul_bf16 = C >= 256  # only worth it if the MXU could become binding

    # --- pixel-tile size / VMEM budget (per generation) ----------------------
    vmem_cap = _vmem_capacity_bytes()
    budget = int(vmem_cap * 0.7)
    # per-pixel VMEM bytes: double-buffered in/out tiles + ~5 f32 compute temps
    bytes_per_pix = C * (2 * io_itemsize + 2 * io_itemsize + 5 * 4)
    param_bytes = 2 * (2 * C * C * 4 + 2 * C * 4)  # gamma/wa + beta/ba (dbl-buffered)

    bp = max(128, (min(int(block_pix), ((hw + 127) // 128) * 128) // 128) * 128)
    bp_fit = max(128, ((budget - param_bytes) // max(bytes_per_pix, 1)) // 128 * 128)
    bp = min(bp, bp_fit)

    # v7x has 2 TensorCores/chip: make sure the ("parallel","parallel") grid has
    # enough steps to keep both busy for small N * ceil(hw/bp).
    if _tensorcores_per_chip() > 1:
        while N * pl.cdiv(hw, bp) < 8 and bp > 128:
            bp = max(128, ((bp // 2) // 128) * 128)

    footprint = bytes_per_pix * bp + param_bytes
    vmem_limit = min(max(footprint + (8 << 20), 32 << 20), int(vmem_cap * 0.85))

    # Ragged last pixel tile is handled by Pallas: only the in-bounds lanes of
    # the boundary block are read/written, and columns are independent, so no
    # wrapper-side pad or output slice (each of those costs a full HBM pass).
    grid = (N, pl.cdiv(hw, bp))
    kernel = functools.partial(_gdn_adapter_kernel, inverse=inverse,
                               small_c=small_c, matmul_bf16=bool(matmul_bf16))

    out_flat = pl.pallas_call(
        kernel,
        out_shape=jax.ShapeDtypeStruct((N, C, hw), x_flat.dtype),
        grid_spec=pltpu.PrefetchScalarGridSpec(
            num_scalar_prefetch=0,
            grid=grid,
            in_specs=[
                pl.BlockSpec((None, C, bp), lambda n, p: (n, 0, p)),  # x tile
                pl.BlockSpec((C, C), lambda n, p: (0, 0)),            # gamma
                pl.BlockSpec((C, 1), lambda n, p: (0, 0)),            # beta
                pl.BlockSpec((C, C), lambda n, p: (0, 0)),            # I + adapter W
                pl.BlockSpec((C, 1), lambda n, p: (0, 0)),            # adapter b
            ],
            out_specs=pl.BlockSpec((None, C, bp), lambda n, p: (n, 0, p)),
        ),
        compiler_params=pltpu.CompilerParams(
            dimension_semantics=("parallel", "parallel"),
            vmem_limit_bytes=int(vmem_limit)),
    )(x_flat, gamma_eff, beta_2d, wa_eff, ba_2d)

    return out_flat.reshape(N, C, H, W)


# ----------------------------------------------------------------------------
# Pure-JAX reference (for correctness check)
# ----------------------------------------------------------------------------
def gdn_adapter_reference(x_nchw, params, *, inverse=False):
    N, C, H, W = x_nchw.shape
    beta_eff = _nonneg_forward(params["beta"], minimum=params["beta_min"])
    gamma_eff = _nonneg_forward(params["gamma"])
    x_rows = jnp.transpose(x_nchw, (0, 2, 3, 1)).reshape(-1, C).astype(jnp.float32)
    norm = (x_rows ** 2) @ gamma_eff.T + beta_eff[None, :]
    norm = jnp.sqrt(norm) if inverse else jax.lax.rsqrt(norm)
    ada = norm @ params["adapter_w"].T + params["adapter_b"][None, :]
    norm = norm + ada
    out = x_rows * norm
    return out.reshape(N, H, W, C).transpose(0, 3, 1, 2)


if __name__ == "__main__":
    key = jax.random.PRNGKey(0)
    kx, kp = jax.random.split(key)

    N, C, H, W = 2, 4, 16, 16
    x = jax.random.normal(kx, (N, C, H, W), jnp.float32)

    # adapter_std nonzero so the adapter branch is exercised (module default 0.0
    # would make the adapter contribute exactly zero).
    params = make_gdn_adapter_params(C, beta_min=1e-6, gamma_init=0.1,
                                     adapter_std=0.05, adapter_mean=0.0, key=kp)

    # GDN (rsqrt) and inverse-GDN (sqrt) paths, f32 I/O.
    for inv in (False, True):
        out = jax.block_until_ready(gdn_adapter_forward(x, params, inverse=inv))
        ref = gdn_adapter_reference(x, params, inverse=inv)
        np.testing.assert_allclose(np.asarray(out), np.asarray(ref),
                                   rtol=1e-5, atol=1e-5)

    # Ragged H*W (not a multiple of the pixel tile): exercises the partial
    # last block (no pad / slice on the wrapper side).
    x_r = jax.random.normal(jax.random.PRNGKey(1), (N, C, 16, 15), jnp.float32)
    out_r = jax.block_until_ready(gdn_adapter_forward(x_r, params, inverse=False))
    ref_r = gdn_adapter_reference(x_r, params, inverse=False)
    np.testing.assert_allclose(np.asarray(out_r), np.asarray(ref_r),
                               rtol=1e-5, atol=1e-5)

    # bf16 I/O path (halves HBM traffic; in-kernel math stays f32).
    x_b = x.astype(jnp.bfloat16)
    out_b = jax.block_until_ready(gdn_adapter_forward(x_b, params, inverse=False))
    ref_b = gdn_adapter_reference(x_b.astype(jnp.float32), params, inverse=False)
    np.testing.assert_allclose(np.asarray(out_b.astype(jnp.float32)),
                               np.asarray(ref_b), rtol=1e-2, atol=1e-2)

    print("KERNEL_OK")
</pallas_src>

<mosaic_0001>
module attributes {stable_mosaic.version = 11 : i64} {
  func.func @_gdn_adapter_kernel(%arg0: i32, %arg1: i32, %arg2: memref<1x4x256xf32, #tpu.memory_space<vmem>>, %arg3: memref<4x4xf32, #tpu.memory_space<vmem>>, %arg4: memref<4x1xf32, #tpu.memory_space<vmem>>, %arg5: memref<4x4xf32, #tpu.memory_space<vmem>>, %arg6: memref<4x1xf32, #tpu.memory_space<vmem>>, %arg7: memref<1x4x256xf32, #tpu.memory_space<vmem>>) attributes {dimension_semantics = [#tpu.dimension_semantics<parallel>, #tpu.dimension_semantics<parallel>], iteration_bounds = array<i64: 2, 1>, scalar_prefetch = 0 : i64, scratch_operands = 0 : i64, tpu.core_type = #tpu.core_type<tc>, window_params = [{transform_indices = @transform_0, window_bounds = array<i64: 1, 4, 256>}, {pipeline_mode = #tpu.pipeline_mode<synchronous>, transform_indices = @transform_1, window_bounds = array<i64: 4, 4>}, {pipeline_mode = #tpu.pipeline_mode<synchronous>, transform_indices = @transform_2, window_bounds = array<i64: 4, 1>}, {pipeline_mode = #tpu.pipeline_mode<synchronous>, transform_indices = @transform_3, window_bounds = array<i64: 4, 4>}, {pipeline_mode = #tpu.pipeline_mode<synchronous>, transform_indices = @transform_4, window_bounds = array<i64: 4, 1>}, {transform_indices = @transform_5, window_bounds = array<i64: 1, 4, 256>}]} {
    %c0 = arith.constant 0 : index
    %c0_0 = arith.constant 0 : index
    %c0_1 = arith.constant 0 : index
    %0 = vector.load %arg2[%c0, %c0_0, %c0_1] : memref<1x4x256xf32, #tpu.memory_space<vmem>>, vector<1x4x256xf32>
    %1 = vector.shape_cast %0 : vector<1x4x256xf32> to vector<4x256xf32>
    %c0_2 = arith.constant 0 : index
    %c0_3 = arith.constant 0 : index
    %2 = vector.load %arg3[%c0_2, %c0_3] : memref<4x4xf32, #tpu.memory_space<vmem>>, vector<4x4xf32>
    %c0_4 = arith.constant 0 : index
    %c0_5 = arith.constant 0 : index
    %3 = vector.load %arg4[%c0_4, %c0_5] : memref<4x1xf32, #tpu.memory_space<vmem>>, vector<4x1xf32>
    %c0_6 = arith.constant 0 : index
    %c0_7 = arith.constant 0 : index
    %4 = vector.load %arg5[%c0_6, %c0_7] : memref<4x4xf32, #tpu.memory_space<vmem>>, vector<4x4xf32>
    %c0_8 = arith.constant 0 : index
    %c0_9 = arith.constant 0 : index
    %5 = vector.load %arg6[%c0_8, %c0_9] : memref<4x1xf32, #tpu.memory_space<vmem>>, vector<4x1xf32>
    %6 = arith.mulf %1, %1 : vector<4x256xf32>
    %7 = vector.extract_strided_slice %2 {offsets = [0, 0], sizes = [4, 1], strides = [1, 1]} : vector<4x4xf32> to vector<4x1xf32>
    %8 = vector.extract_strided_slice %6 {offsets = [0, 0], sizes = [1, 256], strides = [1, 1]} : vector<4x256xf32> to vector<1x256xf32>
    %9 = vector.broadcast %7 : vector<4x1xf32> to vector<4x256xf32>
    %10 = vector.broadcast %8 : vector<1x256xf32> to vector<4x256xf32>
    %11 = arith.mulf %9, %10 : vector<4x256xf32>
    %12 = vector.extract_strided_slice %2 {offsets = [0, 1], sizes = [4, 1], strides = [1, 1]} : vector<4x4xf32> to vector<4x1xf32>
    %13 = vector.extract_strided_slice %6 {offsets = [1, 0], sizes = [1, 256], strides = [1, 1]} : vector<4x256xf32> to vector<1x256xf32>
    %14 = vector.broadcast %12 : vector<4x1xf32> to vector<4x256xf32>
    %15 = vector.broadcast %13 : vector<1x256xf32> to vector<4x256xf32>
    %16 = arith.mulf %14, %15 : vector<4x256xf32>
    %17 = arith.addf %11, %16 : vector<4x256xf32>
    %18 = vector.extract_strided_slice %2 {offsets = [0, 2], sizes = [4, 1], strides = [1, 1]} : vector<4x4xf32> to vector<4x1xf32>
    %19 = vector.extract_strided_slice %6 {offsets = [2, 0], sizes = [1, 256], strides = [1, 1]} : vector<4x256xf32> to vector<1x256xf32>
    %20 = vector.broadcast %18 : vector<4x1xf32> to vector<4x256xf32>
    %21 = vector.broadcast %19 : vector<1x256xf32> to vector<4x256xf32>
    %22 = arith.mulf %20, %21 : vector<4x256xf32>
    %23 = arith.addf %17, %22 : vector<4x256xf32>
    %24 = vector.extract_strided_slice %2 {offsets = [0, 3], sizes = [4, 1], strides = [1, 1]} : vector<4x4xf32> to vector<4x1xf32>
    %25 = vector.extract_strided_slice %6 {offsets = [3, 0], sizes = [1, 256], strides = [1, 1]} : vector<4x256xf32> to vector<1x256xf32>
    %26 = vector.broadcast %24 : vector<4x1xf32> to vector<4x256xf32>
    %27 = vector.broadcast %25 : vector<1x256xf32> to vector<4x256xf32>
    %28 = arith.mulf %26, %27 : vector<4x256xf32>
    %29 = arith.addf %23, %28 : vector<4x256xf32>
    %30 = vector.broadcast %3 : vector<4x1xf32> to vector<4x256xf32>
    %31 = arith.addf %29, %30 : vector<4x256xf32>
    %32 = math.rsqrt %31 : vector<4x256xf32>
    %33 = vector.extract_strided_slice %4 {offsets = [0, 0], sizes = [4, 1], strides = [1, 1]} : vector<4x4xf32> to vector<4x1xf32>
    %34 = vector.extract_strided_slice %32 {offsets = [0, 0], sizes = [1, 256], strides = [1, 1]} : vector<4x256xf32> to vector<1x256xf32>
    %35 = vector.broadcast %33 : vector<4x1xf32> to vector<4x256xf32>
    %36 = vector.broadcast %34 : vector<1x256xf32> to vector<4x256xf32>
    %37 = arith.mulf %35, %36 : vector<4x256xf32>
    %38 = vector.extract_strided_slice %4 {offsets = [0, 1], sizes = [4, 1], strides = [1, 1]} : vector<4x4xf32> to vector<4x1xf32>
    %39 = vector.extract_strided_slice %32 {offsets = [1, 0], sizes = [1, 256], strides = [1, 1]} : vector<4x256xf32> to vector<1x256xf32>
    %40 = vector.broadcast %38 : vector<4x1xf32> to vector<4x256xf32>
    %41 = vector.broadcast %39 : vector<1x256xf32> to vector<4x256xf32>
    %42 = arith.mulf %40, %41 : vector<4x256xf32>
    %43 = arith.addf %37, %42 : vector<4x256xf32>
    %44 = vector.extract_strided_slice %4 {offsets = [0, 2], sizes = [4, 1], strides = [1, 1]} : vector<4x4xf32> to vector<4x1xf32>
    %45 = vector.extract_strided_slice %32 {offsets = [2, 0], sizes = [1, 256], strides = [1, 1]} : vector<4x256xf32> to vector<1x256xf32>
    %46 = vector.broadcast %44 : vector<4x1xf32> to vector<4x256xf32>
    %47 = vector.broadcast %45 : vector<1x256xf32> to vector<4x256xf32>
    %48 = arith.mulf %46, %47 : vector<4x256xf32>
    %49 = arith.addf %43, %48 : vector<4x256xf32>
    %50 = vector.extract_strided_slice %4 {offsets = [0, 3], sizes = [4, 1], strides = [1, 1]} : vector<4x4xf32> to vector<4x1xf32>
    %51 = vector.extract_strided_slice %32 {offsets = [3, 0], sizes = [1, 256], strides = [1, 1]} : vector<4x256xf32> to vector<1x256xf32>
    %52 = vector.broadcast %50 : vector<4x1xf32> to vector<4x256xf32>
    %53 = vector.broadcast %51 : vector<1x256xf32> to vector<4x256xf32>
    %54 = arith.mulf %52, %53 : vector<4x256xf32>
    %55 = arith.addf %49, %54 : vector<4x256xf32>
    %56 = vector.broadcast %5 : vector<4x1xf32> to vector<4x256xf32>
    %57 = arith.addf %55, %56 : vector<4x256xf32>
    %58 = arith.mulf %1, %57 : vector<4x256xf32>
    %c0_10 = arith.constant 0 : index
    %c0_11 = arith.constant 0 : index
    %c0_12 = arith.constant 0 : index
    %59 = vector.load %arg7[%c0_10, %c0_11, %c0_12] : memref<1x4x256xf32, #tpu.memory_space<vmem>>, vector<1x4x256xf32>
    %60 = vector.shape_cast %59 : vector<1x4x256xf32> to vector<4x256xf32>
    %61 = vector.shape_cast %58 : vector<4x256xf32> to vector<1x4x256xf32>
    tpu.vector_store %arg7[%c0_10, %c0_11, %c0_12], %61 {strides = array<i32>} : memref<1x4x256xf32, #tpu.memory_space<vmem>>, vector<1x4x256xf32>,
    return
  }
  func.func @transform_0(%arg0: i32, %arg1: i32) -> (i32, i32, i32) {
    %c0_i32 = arith.constant 0 : i32
    %c0_i32_0 = arith.constant 0 : i32
    return %arg0, %c0_i32, %arg1 : i32, i32, i32
  }
  func.func @transform_1(%arg0: i32, %arg1: i32) -> (i32, i32) {
    %c0_i32 = arith.constant 0 : i32
    %c0_i32_0 = arith.constant 0 : i32
    %c0_i32_1 = arith.constant 0 : i32
    return %c0_i32, %c0_i32_0 : i32, i32
  }
  func.func @transform_2(%arg0: i32, %arg1: i32) -> (i32, i32) {
    %c0_i32 = arith.constant 0 : i32
    %c0_i32_0 = arith.constant 0 : i32
    %c0_i32_1 = arith.constant 0 : i32
    return %c0_i32, %c0_i32_0 : i32, i32
  }
  func.func @transform_3(%arg0: i32, %arg1: i32) -> (i32, i32) {
    %c0_i32 = arith.constant 0 : i32
    %c0_i32_0 = arith.constant 0 : i32
    %c0_i32_1 = arith.constant 0 : i32
    return %c0_i32, %c0_i32_0 : i32, i32
  }
  func.func @transform_4(%arg0: i32, %arg1: i32) -> (i32, i32) {
    %c0_i32 = arith.constant 0 : i32
    %c0_i32_0 = arith.constant 0 : i32
    %c0_i32_1 = arith.constant 0 : i32
    return %c0_i32, %c0_i32_0 : i32, i32
  }
  func.func @transform_5(%arg0: i32, %arg1: i32) -> (i32, i32, i32) {
    %c0_i32 = arith.constant 0 : i32
    %c0_i32_0 = arith.constant 0 : i32
    return %arg0, %c0_i32, %arg1 : i32, i32, i32
  }
}

</mosaic_0001>

<llo_original>
// kernel: tpu_custom_call.1
$region0: #{tpu_custom_call.1}
  #allocation0 [shape = 'u32[]', space=smem, size = 0x4, offset = 0x4, fixed_abs, tag = 'smem constant byte address 0x4 - core index']
  #allocation1 [shape = 'u32[144,128]{1,0:T(1,128)}', space=vmem, size = 0x12000, scoped, tag = 'internal scratch']
  %s0 = inlined_call_operand.hbm [shape: f32[2,4,256], index: 0, kind: input, shape index: {}]
  %s1 = inlined_call_operand.vmem [shape: f32[4,4], index: 1, kind: input, shape index: {}]
  %s2 = inlined_call_operand.vmem [shape: f32[4,1], index: 2, kind: input, shape index: {}]
  %s3 = inlined_call_operand.vmem [shape: f32[4,4], index: 3, kind: input, shape index: {}]
  %s4 = inlined_call_operand.vmem [shape: f32[4,1], index: 4, kind: input, shape index: {}]
  %s5 = inlined_call_operand.hbm [shape: f32[2,4,256], index: 5, kind: output, shape index: {}]
  %s6 = sld [smem:[#allocation0]]
  $region57: #{tpu_custom_call.1} parent=0
    _
  %s8 = ssub.s32 1, %s6
  %s9 = scalar_select 0, %s8, %s6
  $region1: #{tpu_custom_call.1} parent=0
    #allocation2 [shape = 'u8[8192]{0}', space=vmem, size = 0x2000, scoped, tag = 'input window, operand 0']
    #allocation3 [shape = 's32[2]{0}', space=sflag, size = 0x8, scoped, tag = 'scoped memory for tpu_custom_call.1']
    #allocation4 [shape = 's32[2]{0}', space=sflag, size = 0x8, scoped, tag = 'scoped memory for tpu_custom_call.1']
    #allocation5 [shape = 'u8[8192]{0}', space=vmem, size = 0x2000, scoped, tag = 'output window, operand 0']
    %10 = vsyncpa [#allocation3], 0
    %s11 = scalar_lea.sflag [#allocation3], 1
    %12 = vsyncpa %s11, 0
    %13 = vsyncpa [#allocation4], 0
    %s14 = scalar_lea.sflag [#allocation4], 1
    %15 = vsyncpa %s14, 0
    loop: start=0, step=1, limit=4
    $region2: #{tpu_custom_call.1} parent=1 // loop_pre_header
      _
    $region3: #{tpu_custom_call.1} parent=1 // loop_header
      %s17 = sphi 0, %s21
      %p18 = scmp.ge.s32.totalorder %s17, 4
      %s24 = sphi 0, %s36
      %s25 = sphi 0, %s32
      %s26 = sphi 0, %s24
      %s27 = sphi 0, %s25
      %s28 = sphi 0, %s26
      %s29 = sphi 0, %s27
      %s41 = sphi 0, %s43
      %s44 = sphi 0, %s41
      %s45 = sphi 0, %s44
      %s61 = sphi 0, %s45
      %s65 = sphi 0, %s65
      %s67 = sphi 0, %s65
      %s68 = sphi 0, %s67
      %s82 = sphi 0, %s68
      %s86 = sphi 0, %s86
      %s88 = sphi 0, %s86
      %s89 = sphi 0, %s88
      %s103 = sphi 0, %s89
      %s107 = sphi 0, %s107
      %s109 = sphi 0, %s107
      %s110 = sphi 0, %s109
      %s124 = sphi 0, %s110
      %s128 = sphi 0, %s128
      %s130 = sphi 0, %s128
      %s131 = sphi 0, %s130
      %s145 = sphi 0, %s131
      %s153 = sphi 0, %s155
      %s156 = sphi 0, %s153
      %s157 = sphi 0, %s156
      %s173 = sphi 0, %s157
    $region4: #{tpu_custom_call.1} parent=1 // loop_header_branch
      %20 = sbr.rel (%p18) target = $region8
    $region5: #{tpu_custom_call.1} parent=1 // loop_body
      %s22 = ssub.s32 %s17, 1
      %s23 = ssub.s32 %s17, 2
      %s30 = sadd.s32 1, %s25
      %p31 = scmp.ge.s32.totalorder %s30, 1
      %s32 = scalar_select %p31, 0, %s30
      %s33 = sadd.s32 1, %s24
      %s34 = scalar_select %p31, %s33, %s24
      %p35 = scmp.ge.s32.totalorder %s34, 2
      %s36 = scalar_select %p35, 0, %s34
      %s37 = ssub.s32 %s24, %s36
      %s38 = ssub.s32 %s25, %s32
      %s39 = sor.u32 %s37, %s38
      %p40 = scmp.eq.s32.totalorder %s39, 0
      %s42 = sadd.s32 %s41, 1
      %s43 = scalar_select %p40, %s41, %s42
      %p46 = pneg %p40
      %p47 = scmp.eq.s32.totalorder %s17, 1
      %p48 = por %p46, %p47
      %p49 = scmp.ne.s32.totalorder %s41, %s44
      %p50 = scmp.eq.s32.totalorder %s17, 0
      %p51 = por %p49, %p50
      %p52 = scmp.ne.s32.totalorder %s41, %s44
      %p53 = scmp.eq.s32.totalorder %s22, 1
      %p54 = por %p52, %p53
      %p55 = scmp.ne.s32.totalorder %s44, %s45
      %p56 = scmp.eq.s32.totalorder %s22, 0
      %p57 = por %p55, %p56
      %p58 = scmp.ne.s32.totalorder %s44, %s45
      %p59 = scmp.eq.s32.totalorder %s23, 1
      %p60 = por %p58, %p59
      %p62 = scmp.ne.s32.totalorder %s45, %s61
      %p63 = scmp.eq.s32.totalorder %s23, 0
      %p64 = por %p62, %p63
      %s66 = sadd.s32 %s65, 1
      %p69 = scmp.eq.s32.totalorder %s17, 1
      %p70 = scmp.ne.s32.totalorder %s65, %s67
      %p71 = scmp.eq.s32.totalorder %s17, 0
      %p72 = por %p70, %p71
      %p73 = scmp.ne.s32.totalorder %s65, %s67
      %p74 = scmp.eq.s32.totalorder %s22, 1
      %p75 = por %p73, %p74
      %p76 = scmp.ne.s32.totalorder %s67, %s68
      %p77 = scmp.eq.s32.totalorder %s22, 0
      %p78 = por %p76, %p77
      %p79 = scmp.ne.s32.totalorder %s67, %s68
      %p80 = scmp.eq.s32.totalorder %s23, 1
      %p81 = por %p79, %p80
      %p83 = scmp.ne.s32.totalorder %s68, %s82
      %p84 = scmp.eq.s32.totalorder %s23, 0
      %p85 = por %p83, %p84
      %s87 = sadd.s32 %s86, 1
      %p90 = scmp.eq.s32.totalorder %s17, 1
      %p91 = scmp.ne.s32.totalorder %s86, %s88
      %p92 = scmp.eq.s32.totalorder %s17, 0
      %p93 = por %p91, %p92
      %p94 = scmp.ne.s32.totalorder %s86, %s88
      %p95 = scmp.eq.s32.totalorder %s22, 1
      %p96 = por %p94, %p95
      %p97 = scmp.ne.s32.totalorder %s88, %s89
      %p98 = scmp.eq.s32.totalorder %s22, 0
      %p99 = por %p97, %p98
      %p100 = scmp.ne.s32.totalorder %s88, %s89
      %p101 = scmp.eq.s32.totalorder %s23, 1
      %p102 = por %p100, %p101
      %p104 = scmp.ne.s32.totalorder %s89, %s103
      %p105 = scmp.eq.s32.totalorder %s23, 0
      %p106 = por %p104, %p105
      %s108 = sadd.s32 %s107, 1
      %p111 = scmp.eq.s32.totalorder %s17, 1
      %p112 = scmp.ne.s32.totalorder %s107, %s109
      %p113 = scmp.eq.s32.totalorder %s17, 0
      %p114 = por %p112, %p113
      %p115 = scmp.ne.s32.totalorder %s107, %s109
      %p116 = scmp.eq.s32.totalorder %s22, 1
      %p117 = por %p115, %p116
      %p118 = scmp.ne.s32.totalorder %s109, %s110
      %p119 = scmp.eq.s32.totalorder %s22, 0
      %p120 = por %p118, %p119
      %p121 = scmp.ne.s32.totalorder %s109, %s110
      %p122 = scmp.eq.s32.totalorder %s23, 1
      %p123 = por %p121, %p122
      %p125 = scmp.ne.s32.totalorder %s110, %s124
      %p126 = scmp.eq.s32.totalorder %s23, 0
      %p127 = por %p125, %p126
      %s129 = sadd.s32 %s128, 1
      %p132 = scmp.eq.s32.totalorder %s17, 1
      %p133 = scmp.ne.s32.totalorder %s128, %s130
      %p134 = scmp.eq.s32.totalorder %s17, 0
      %p135 = por %p133, %p134
      %p136 = scmp.ne.s32.totalorder %s128, %s130
      %p137 = scmp.eq.s32.totalorder %s22, 1
      %p138 = por %p136, %p137
      %p139 = scmp.ne.s32.totalorder %s130, %s131
      %p140 = scmp.eq.s32.totalorder %s22, 0
      %p141 = por %p139, %p140
      %p142 = scmp.ne.s32.totalorder %s130, %s131
      %p143 = scmp.eq.s32.totalorder %s23, 1
      %p144 = por %p142, %p143
      %p146 = scmp.ne.s32.totalorder %s131, %s145
      %p147 = scmp.eq.s32.totalorder %s23, 0
      %p148 = por %p146, %p147
      %s149 = ssub.s32 %s24, %s36
      %s150 = ssub.s32 %s25, %s32
      %s151 = sor.u32 %s149, %s150
      %p152 = scmp.eq.s32.totalorder %s151, 0
      %s154 = sadd.s32 %s153, 1
      %s155 = scalar_select %p152, %s153, %s154
      %p158 = pneg %p152
      %p159 = scmp.eq.s32.totalorder %s17, 1
      %p160 = por %p158, %p159
      %p161 = scmp.ne.s32.totalorder %s153, %s156
      %p162 = scmp.eq.s32.totalorder %s17, 0
      %p163 = por %p161, %p162
      %p164 = scmp.ne.s32.totalorder %s153, %s156
      %p165 = scmp.eq.s32.totalorder %s22, 1
      %p166 = por %p164, %p165
      %p167 = scmp.ne.s32.totalorder %s156, %s157
      %p168 = scmp.eq.s32.totalorder %s22, 0
      %p169 = por %p167, %p168
      %p170 = scmp.ne.s32.totalorder %s156, %s157
      %p171 = scmp.eq.s32.totalorder %s23, 1
      %p172 = por %p170, %p171
      %p174 = scmp.ne.s32.totalorder %s157, %s173
      %p175 = scmp.eq.s32.totalorder %s23, 0
      %p176 = por %p174, %p175
      %p177 = scmp.le.s32.totalorder 1, %s17
      %p178 = scmp.lt.s32.totalorder %s17, 3
      %p179 = pnand %p177, %p178
      %p180 = pneg %p179
      // Predicated region
      $region9: #{tpu_custom_call.1} parent=5 // pred_check
        _
      $region10: #{tpu_custom_call.1} parent=5 // pred_check_branch
        %182 = sbr.rel (%p179) target = $region12
      $region11: #{tpu_custom_call.1} parent=5 // pred_region
        %s183 = ssub.s32 %s17, 1
        // Predicated region
        $region13: #{tpu_custom_call.1} parent=11 // pred_check
          %p184 = pneg %p78
        $region14: #{tpu_custom_call.1} parent=11 // pred_check_branch
          %186 = sbr.rel (%p184) target = $region16
        $region15: #{tpu_custom_call.1} parent=11 // pred_region
          _
        $region16: #{tpu_custom_call.1} parent=11 // pred_fallthru
          _
        // Predicated region
        $region17: #{tpu_custom_call.1} parent=11 // pred_check
          %p187 = pneg %p99
        $region18: #{tpu_custom_call.1} parent=11 // pred_check_branch
          %189 = sbr.rel (%p187) target = $region20
        $region19: #{tpu_custom_call.1} parent=11 // pred_region
          _
        $region20: #{tpu_custom_call.1} parent=11 // pred_fallthru
          _
        // Predicated region
        $region21: #{tpu_custom_call.1} parent=11 // pred_check
          %p190 = pneg %p120
        $region22: #{tpu_custom_call.1} parent=11 // pred_check_branch
          %192 = sbr.rel (%p190) target = $region24
        $region23: #{tpu_custom_call.1} parent=11 // pred_region
          _
        $region24: #{tpu_custom_call.1} parent=11 // pred_fallthru
          _
        // Predicated region
        $region25: #{tpu_custom_call.1} parent=11 // pred_check
          %p193 = pneg %p141
        $region26: #{tpu_custom_call.1} parent=11 // pred_check_branch
          %195 = sbr.rel (%p193) target = $region28
        $region27: #{tpu_custom_call.1} parent=11 // pred_region
          _
        $region28: #{tpu_custom_call.1} parent=11 // pred_fallthru
          _
      $region12: #{tpu_custom_call.1} parent=5 // pred_fallthru
        _
      %p196 = scmp.lt.s32.totalorder %s17, 2
      // Predicated region
      $region29: #{tpu_custom_call.1} parent=5 // pred_check
        %p197 = pneg %p196
      $region30: #{tpu_custom_call.1} parent=5 // pred_check_branch
        %199 = sbr.rel (%p197) target = $region32
      $region31: #{tpu_custom_call.1} parent=5 // pred_region
        // Predicated region
        $region33: #{tpu_custom_call.1} parent=31 // pred_check
          %p200 = pneg %p51
        $region34: #{tpu_custom_call.1} parent=31 // pred_check_branch
          %202 = sbr.rel (%p200) target = $region36
        $region35: #{tpu_custom_call.1} parent=31 // pred_region
          %s203 = sand.u32 %s41, 1
          %s204 = scalar_lea.sflag [#allocation3], %s203
          %s205 = sand.u32 %s41, 1
          %s206 = smul.addr %s205, 8
          %s207 = scalar_lea.vmem [#allocation2], %s206
          %s208 = smul.u32 2, %s25
          %s210 = ssub.s32 128, 128
          %211 = vsyncadd %s204, %s210
          %s212 = smul.addr %s24, 2
          %s213 = sadd.s32 %s208, %s212
          %s214 = smul.addr %s213, 64
          %s215 = scalar_lea.hbm %s0, %s214
          %s217 = sshll.u32 %s207, 4
          %s218 = int_to_ptr.vmem [resolvable:$true] %s217
          %220 = dma.hbm_to_vmem [thread:$0]  %s215, 128, %s218, %s204
        $region36: #{tpu_custom_call.1} parent=31 // pred_fallthru
          _
      $region32: #{tpu_custom_call.1} parent=5 // pred_fallthru
        _
      %p221 = scmp.le.s32.totalorder 1, %s17
      %p222 = scmp.lt.s32.totalorder %s17, 3
      %p223 = pnand %p221, %p222
      %p224 = pneg %p223
      // Predicated region
      $region37: #{tpu_custom_call.1} parent=5 // pred_check
        _
      $region38: #{tpu_custom_call.1} parent=5 // pred_check_branch
        %226 = sbr.rel (%p223) target = $region40
      $region39: #{tpu_custom_call.1} parent=5 // pred_region
        %s227 = ssub.s32 %s17, 1
        %s228 = sand.u32 %s44, 1
        %s229 = scalar_lea.sflag [#allocation3], %s228
        %s230 = sand.u32 %s44, 1
        %s231 = smul.addr %s230, 8
        %s232 = scalar_lea.vmem [#allocation2], %s231
        // Predicated region
        $region41: #{tpu_custom_call.1} parent=39 // pred_check
          %p233 = pneg %p57
        $region42: #{tpu_custom_call.1} parent=39 // pred_check_branch
          %235 = sbr.rel (%p233) target = $region44
        $region43: #{tpu_custom_call.1} parent=39 // pred_region
          %236 = dma.done %s229, 128
        $region44: #{tpu_custom_call.1} parent=39 // pred_fallthru
          _
        %s237 = sand.u32 %s44, 1
        %s238 = scalar_lea.sflag [#allocation3], %s237
        %s239 = sand.u32 %s44, 1
        %s240 = smul.addr %s239, 8
        %s241 = scalar_lea.vmem [#allocation2], %s240
        %p242 = pneg %p57
        %p243 = pneg %p54
        %p244 = pneg %p78
        %p245 = pneg %p75
        %p246 = pneg %p99
        %p247 = pneg %p96
        %p248 = pneg %p120
        %p249 = pneg %p117
        %p250 = pneg %p141
        %p251 = pneg %p138
        %p252 = pneg %p169
        %p253 = pneg %p166
        %s254 = sand.u32 %s156, 1
        %s255 = scalar_lea.sflag [#allocation4], %s254
        %s256 = sand.u32 %s156, 1
        %s257 = smul.addr %s256, 8
        %s258 = scalar_lea.vmem [#allocation5], %s257
        %s259 = smul.u32 2, %s27
        %s260 = smul.u32 2, %s27
        %v261 = vld [vmem:[%s232] sm:$0xff]
        %v262 = vld [vmem:[%s1] sm:$0xf]
        %v263 = vld [vmem:[%s2] sm:$0xf]
        %v264 = vld [vmem:[%s3] sm:$0xf]
        %v265 = vld [vmem:[%s4] sm:$0xf]
        %v266 = vmul.f32 %v261, %v261
        %268 = vset.pattern.permute.xlu0 0
        %269 = vperm.xlu0 %268, %v262
        %v270 = vpop.permute.xlu0 %269
        %v273 = vlaneseq
        %v274 = vshrl.u32 %v273, 7
        %v275 = vsub.s32 0, %v274
        %v276 = vrot.slane %v266, %v275
        %v277 = vlaneseq
        %v278 = vshrl.u32 %v277, 7
        %v279 = vsub.s32 4, %v278
        %v280 = vrot.slane %v266, %v279
        %v283 = vlaneseq
        %v284 = vshrl.u32 %v283, 7
        %v285 = vsub.s32 0, %v284
        %v286 = vrot.slane %v276, %v285
        %v287 = vlaneseq
        %v288 = vshrl.u32 %v287, 7
        %v289 = vsub.s32 0, %v288
        %v290 = vrot.slane %v280, %v289
        %v291 = vmul.f32 %v270, %v286
        %v292 = vmul.f32 %v270, %v290
        %293 = vset.pattern.permute.xlu0 1
        %294 = vperm.xlu0 %293, %v262
        %v295 = vpop.permute.xlu0 %294
        %v297 = vlaneseq
        %v298 = vshrl.u32 %v297, 7
        %v299 = vsub.s32 1, %v298
        %v300 = vrot.slane %v266, %v299
        %v301 = vlaneseq
        %v302 = vshrl.u32 %v301, 7
        %v303 = vsub.s32 5, %v302
        %v304 = vrot.slane %v266, %v303
        %v307 = vlaneseq
        %v308 = vshrl.u32 %v307, 7
        %v309 = vsub.s32 1, %v308
        %v310 = vrot.slane %v300, %v309
        %v311 = vlaneseq
        %v312 = vshrl.u32 %v311, 7
        %v313 = vsub.s32 1, %v312
        %v314 = vrot.slane %v304, %v313
        %v315 = vmul.f32 %v295, %v310
        %v316 = vmul.f32 %v295, %v314
        %v317 = vadd.f32 %v291, %v315
        %v318 = vadd.f32 %v292, %v316
        %319 = vset.pattern.permute.xlu0 2
        %320 = vperm.xlu0 %319, %v262
        %v321 = vpop.permute.xlu0 %320
        %v323 = vlaneseq
        %v324 = vshrl.u32 %v323, 7
        %v325 = vsub.s32 2, %v324
        %v326 = vrot.slane %v266, %v325
        %v327 = vlaneseq
        %v328 = vshrl.u32 %v327, 7
        %v329 = vsub.s32 6, %v328
        %v330 = vrot.slane %v266, %v329
        %v333 = vlaneseq
        %v334 = vshrl.u32 %v333, 7
        %v335 = vsub.s32 2, %v334
        %v336 = vrot.slane %v326, %v335
        %v337 = vlaneseq
        %v338 = vshrl.u32 %v337, 7
        %v339 = vsub.s32 2, %v338
        %v340 = vrot.slane %v330, %v339
        %v341 = vmul.f32 %v321, %v336
        %v342 = vmul.f32 %v321, %v340
        %v343 = vadd.f32 %v317, %v341
        %v344 = vadd.f32 %v318, %v342
        %345 = vset.pattern.permute.xlu0 3
        %346 = vperm.xlu0 %345, %v262
        %v347 = vpop.permute.xlu0 %346
        %v349 = vlaneseq
        %v350 = vshrl.u32 %v349, 7
        %v351 = vsub.s32 3, %v350
        %v352 = vrot.slane %v266, %v351
        %v353 = vlaneseq
        %v354 = vshrl.u32 %v353, 7
        %v355 = vsub.s32 7, %v354
        %v356 = vrot.slane %v266, %v355
        %v359 = vlaneseq
        %v360 = vshrl.u32 %v359, 7
        %v361 = vsub.s32 3, %v360
        %v362 = vrot.slane %v352, %v361
        %v363 = vlaneseq
        %v364 = vshrl.u32 %v363, 7
        %v365 = vsub.s32 3, %v364
        %v366 = vrot.slane %v356, %v365
        %v367 = vmul.f32 %v347, %v362
        %v368 = vmul.f32 %v347, %v366
        %v369 = vadd.f32 %v343, %v367
        %v370 = vadd.f32 %v344, %v368
        %372 = vset.pattern.permute.xlu0 0
        %373 = vperm.xlu0 %372, %v263
        %v374 = vpop.permute.xlu0 %373
        %v376 = vadd.f32 %v369, %v374
        %v377 = vadd.f32 %v370, %v374
        %v378 = vrsqrt.pop %v376
        %v379 = vrsqrt.pop %v377
        %381 = vset.pattern.permute.xlu0 0
        %382 = vperm.xlu0 %381, %v264
        %v383 = vpop.permute.xlu0 %382
        %v385 = vlaneseq
        %v386 = vshrl.u32 %v385, 7
        %v387 = vsub.s32 0, %v386
        %v388 = vrot.slane %v378, %v387
        %v389 = vlaneseq
        %v390 = vshrl.u32 %v389, 7
        %v391 = vsub.s32 0, %v390
        %v392 = vrot.slane %v379, %v391
        %v393 = vmul.f32 %v383, %v388
        %v394 = vmul.f32 %v383, %v392
        %395 = vset.pattern.permute.xlu0 1
        %396 = vperm.xlu0 %395, %v264
        %v397 = vpop.permute.xlu0 %396
        %v399 = vlaneseq
        %v400 = vshrl.u32 %v399, 7
        %v401 = vsub.s32 1, %v400
        %v402 = vrot.slane %v378, %v401
        %v403 = vlaneseq
        %v404 = vshrl.u32 %v403, 7
        %v405 = vsub.s32 1, %v404
        %v406 = vrot.slane %v379, %v405
        %v407 = vmul.f32 %v397, %v402
        %v408 = vmul.f32 %v397, %v406
        %v409 = vadd.f32 %v393, %v407
        %v410 = vadd.f32 %v394, %v408
        %411 = vset.pattern.permute.xlu0 2
        %412 = vperm.xlu0 %411, %v264
        %v413 = vpop.permute.xlu0 %412
        %v415 = vlaneseq
        %v416 = vshrl.u32 %v415, 7
        %v417 = vsub.s32 2, %v416
        %v418 = vrot.slane %v378, %v417
        %v419 = vlaneseq
        %v420 = vshrl.u32 %v419, 7
        %v421 = vsub.s32 2, %v420
        %v422 = vrot.slane %v379, %v421
        %v423 = vmul.f32 %v413, %v418
        %v424 = vmul.f32 %v413, %v422
        %v425 = vadd.f32 %v409, %v423
        %v426 = vadd.f32 %v410, %v424
        %427 = vset.pattern.permute.xlu0 3
        %428 = vperm.xlu0 %427, %v264
        %v429 = vpop.permute.xlu0 %428
        %v431 = vlaneseq
        %v432 = vshrl.u32 %v431, 7
        %v433 = vsub.s32 3, %v432
        %v434 = vrot.slane %v378, %v433
        %v435 = vlaneseq
        %v436 = vshrl.u32 %v435, 7
        %v437 = vsub.s32 3, %v436
        %v438 = vrot.slane %v379, %v437
        %v439 = vmul.f32 %v429, %v434
        %v440 = vmul.f32 %v429, %v438
        %v441 = vadd.f32 %v425, %v439
        %v442 = vadd.f32 %v426, %v440
        %444 = vset.pattern.permute.xlu0 0
        %445 = vperm.xlu0 %444, %v265
        %v446 = vpop.permute.xlu0 %445
        %v448 = vadd.f32 %v441, %v446
        %v449 = vadd.f32 %v442, %v446
        %v452 = vcombine.low %v448, %v449
        %v454 = vmul.f32 %v261, %v452
        %455 = vst [vmem:[%s258] sm:$0xff] %v454
        %s456 = sand.u32 %s156, 1
        %s457 = scalar_lea.sflag [#allocation4], %s456
        %s458 = sand.u32 %s156, 1
        %s459 = smul.addr %s458, 8
        %s460 = scalar_lea.vmem [#allocation5], %s459
        // Predicated region
        $region45: #{tpu_custom_call.1} parent=39 // pred_check
          %p461 = pneg %p166
        $region46: #{tpu_custom_call.1} parent=39 // pred_check_branch
          %463 = sbr.rel (%p461) target = $region48
        $region47: #{tpu_custom_call.1} parent=39 // pred_region
          %s464 = smul.u32 2, %s27
          %s466 = ssub.s32 128, 128
          %467 = vsyncadd %s457, %s466
          %s468 = smul.addr %s26, 2
          %s469 = sadd.s32 %s464, %s468
          %s470 = smul.addr %s469, 64
          %s471 = scalar_lea.hbm %s5, %s470
          %s473 = sshll.u32 %s460, 4
          %s474 = int_to_ptr.vmem [resolvable:$true] %s473
          %476 = dma.vmem_to_hbm [thread:$0]  %s474, 128, %s471, %s457
        $region48: #{tpu_custom_call.1} parent=39 // pred_fallthru
          _
      $region40: #{tpu_custom_call.1} parent=5 // pred_fallthru
        _
      %p477 = scmp.le.s32.totalorder 2, %s17
      // Predicated region
      $region49: #{tpu_custom_call.1} parent=5 // pred_check
        %p478 = pneg %p477
      $region50: #{tpu_custom_call.1} parent=5 // pred_check_branch
        %480 = sbr.rel (%p478) target = $region52
      $region51: #{tpu_custom_call.1} parent=5 // pred_region
        %s481 = ssub.s32 %s17, 2
        // Predicated region
        $region53: #{tpu_custom_call.1} parent=51 // pred_check
          %p482 = pneg %p172
        $region54: #{tpu_custom_call.1} parent=51 // pred_check_branch
          %484 = sbr.rel (%p482) target = $region56
        $region55: #{tpu_custom_call.1} parent=51 // pred_region
          %s485 = sand.u32 %s157, 1
          %s486 = scalar_lea.sflag [#allocation4], %s485
          %s487 = sand.u32 %s157, 1
          %s488 = smul.addr %s487, 8
          %s489 = scalar_lea.vmem [#allocation5], %s488
          %490 = dma.done %s486, 128
        $region56: #{tpu_custom_call.1} parent=51 // pred_fallthru
          _
      $region52: #{tpu_custom_call.1} parent=5 // pred_fallthru
        _
    $region6: #{tpu_custom_call.1} parent=1 // loop_footer
      %s21 = sadd.s32 1, %s17
    $region7: #{tpu_custom_call.1} parent=1 // loop_footer_branch
      %16 = sbr.rel target = $region3
    $region8: #{tpu_custom_call.1} parent=1 // loop_exit
      _
    %491 = vsyncpa [#allocation3], 1
    %s492 = scalar_lea.sflag [#allocation3], 1
    %493 = vsyncpa %s492, 1
    %494 = vsyncpa [#allocation4], 1
    %s495 = scalar_lea.sflag [#allocation4], 1
    %496 = vsyncpa %s495, 1

</llo_original>
